<compile_context>
chip_gen: v7x
topology: tpu7x:2x2x1
jax: 0.10.0
libtpu: 0.0.40
codegen_flags: <defaults>
</compile_context>

<pallas_src>
import jax
import jax.numpy as jnp
from jax.experimental import pallas as pl
from jax.experimental.pallas import tpu as pltpu


def _target_attention_kernel(q_ref, kv_ref, out_ref):
    # q_ref  : (Bt, E)      this tile's queries
    # kv_ref : (Bt, H, E)   this tile's key/value heads
    # out_ref: (Bt, E)
    q = q_ref[...].astype(jnp.float32)                 # (Bt, E)
    kv = kv_ref[...]                                   # (Bt, H, E), native dtype

    # scores[b, h] = sum_e kv[b, h, e] * q[b, e]
    # VPU broadcast-multiply (q broadcast over H on sublanes) + lane reduce.
    scores = jnp.sum(kv.astype(jnp.float32) * q[:, None, :], axis=-1)  # (Bt, H)

    # First-occurrence argmax over heads, directly on the raw scores
    # (the reference softmax is monotonic per row -> same argmax).
    H = scores.shape[1]
    best = jnp.max(scores, axis=1, keepdims=True)                      # (Bt, 1)
    h_iota = jax.lax.broadcasted_iota(jnp.int32, scores.shape, 1)      # (Bt, H)
    best_idx = jnp.min(jnp.where(scores >= best, h_iota, jnp.int32(H)),
                       axis=1, keepdims=True)                          # (Bt, 1)

    # torch.gather equivalent: one-hot select the winning head row, reduce
    # over H.  Exactly one term per (b, e) is non-zero, so the sum is exact
    # in the native dtype.
    row_iota = jax.lax.broadcasted_iota(jnp.int32, kv.shape, 1)        # (Bt, H, E)
    sel = jnp.where(row_iota == best_idx[:, :, None], kv, jnp.zeros_like(kv))
    out_ref[...] = jnp.sum(sel, axis=1).astype(out_ref.dtype)


def target_attention(query, key_value, *, block_b=1024):
    """query: (B, 1, E), key_value: (B, H, E) -> (B, E)."""
    B, q1, E = query.shape
    Bk, H, Ek = key_value.shape
    assert q1 == 1 and Bk == B and Ek == E

    # Drop the singleton query axis (metadata-only reshape, no HBM copy).
    q2 = query.reshape(B, E)

    # Batch tile: whole batch if small, otherwise a sublane-aligned tile.
    Bt = min(block_b, B)
    if Bt < B:
        Bt = max(8, (Bt // 8) * 8)
    grid = pl.cdiv(B, Bt)   # ragged last block handled by Pallas masking

    return pl.pallas_call(
        _target_attention_kernel,
        out_shape=jax.ShapeDtypeStruct((B, E), key_value.dtype),
        grid_spec=pltpu.PrefetchScalarGridSpec(
            num_scalar_prefetch=0,
            grid=(grid,),
            in_specs=[
                pl.BlockSpec((Bt, E), lambda b: (b, 0)),
                pl.BlockSpec((Bt, H, E), lambda b: (b, 0, 0)),
            ],
            out_specs=pl.BlockSpec((Bt, E), lambda b: (b, 0)),
        ),
        compiler_params=pltpu.CompilerParams(
            dimension_semantics=("parallel",),
            vmem_limit_bytes=32 * 1024 * 1024,
        ),
    )(q2, key_value)


if __name__ == "__main__":
    def reference(query, key_value):
        # pure-JAX mirror of the torch forward
        scores = jnp.einsum("bhe,bqe->bhq", key_value, query)[..., 0]   # (B, H)
        attn = jax.nn.softmax(scores, axis=1)
        idx = jnp.argmax(attn, axis=1)
        return key_value[jnp.arange(query.shape[0]), idx, :]

    key = jax.random.PRNGKey(0)

    # (1) small shape consistent with the module: batch=4, heads=8, emb=32
    B, H, E = 4, 8, 32
    kq, kkv = jax.random.split(key)
    query = jax.random.normal(kq, (B, 1, E), dtype=jnp.float32)
    key_value = jax.random.normal(kkv, (B, H, E), dtype=jnp.float32)
    out = jax.block_until_ready(target_attention(query, key_value))
    assert out.shape == (B, E)
    assert jnp.allclose(out, reference(query, key_value), atol=1e-5), \
        "Pallas output != reference (single-block path)"

    # (2) exercise the multi-step grid with a ragged (masked) last block
    B2 = 100
    kq2, kkv2 = jax.random.split(kkv)
    query2 = jax.random.normal(kq2, (B2, 1, E), dtype=jnp.float32)
    key_value2 = jax.random.normal(kkv2, (B2, H, E), dtype=jnp.float32)
    out2 = jax.block_until_ready(
        target_attention(query2, key_value2, block_b=32))
    assert out2.shape == (B2, E)
    assert jnp.allclose(out2, reference(query2, key_value2), atol=1e-5), \
        "Pallas output != reference (tiled/ragged path)"

    print("KERNEL_OK")
</pallas_src>

<mosaic_0001>
module attributes {stable_mosaic.version = 11 : i64} {
  func.func @_target_attention_kernel(%arg0: i32, %arg1: memref<4x32xf32, #tpu.memory_space<vmem>>, %arg2: memref<4x8x32xf32, #tpu.memory_space<vmem>>, %arg3: memref<4x32xf32, #tpu.memory_space<vmem>>) attributes {dimension_semantics = [#tpu.dimension_semantics<parallel>], iteration_bounds = array<i64: 1>, scalar_prefetch = 0 : i64, scratch_operands = 0 : i64, tpu.core_type = #tpu.core_type<tc>, window_params = [{transform_indices = @transform_0, window_bounds = array<i64: 4, 32>}, {transform_indices = @transform_1, window_bounds = array<i64: 4, 8, 32>}, {transform_indices = @transform_2, window_bounds = array<i64: 4, 32>}]} {
    %c0 = arith.constant 0 : index
    %c0_0 = arith.constant 0 : index
    %0 = vector.load %arg1[%c0, %c0_0] : memref<4x32xf32, #tpu.memory_space<vmem>>, vector<4x32xf32>
    %c0_1 = arith.constant 0 : index
    %c0_2 = arith.constant 0 : index
    %c0_3 = arith.constant 0 : index
    %1 = vector.load %arg2[%c0_1, %c0_2, %c0_3] : memref<4x8x32xf32, #tpu.memory_space<vmem>>, vector<4x8x32xf32>
    %2 = vector.shape_cast %0 : vector<4x32xf32> to vector<4x1x32xf32>
    %3 = vector.broadcast %2 : vector<4x1x32xf32> to vector<4x8x32xf32>
    %4 = arith.mulf %1, %3 : vector<4x8x32xf32>
    %cst = arith.constant dense<0.000000e+00> : vector<4x8xf32>
    %5 = vector.multi_reduction <add>, %4, %cst [2] : vector<4x8x32xf32> to vector<4x8xf32>
    %cst_4 = arith.constant dense<0xFF800000> : vector<4xf32>
    %6 = vector.multi_reduction <maximumf>, %5, %cst_4 [1] : vector<4x8xf32> to vector<4xf32>
    %7 = vector.shape_cast %6 : vector<4xf32> to vector<4x1xf32>
    %8 = tpu.iota {dimensions = array<i32: 1>} : vector<4x8xi32>
    %9 = vector.broadcast %7 : vector<4x1xf32> to vector<4x8xf32>
    %10 = arith.cmpf oge, %5, %9 : vector<4x8xf32>
    %c8_i32 = arith.constant 8 : i32
    %11 = vector.broadcast %c8_i32 : i32 to vector<4x8xi32>
    %12 = arith.select %10, %8, %11 : vector<4x8xi1>, vector<4x8xi32>
    %cst_5 = arith.constant dense<2147483647> : vector<4xi32>
    %13 = vector.multi_reduction <minsi>, %12, %cst_5 [1] : vector<4x8xi32> to vector<4xi32>
    %14 = vector.shape_cast %13 : vector<4xi32> to vector<4x1xi32>
    %15 = tpu.iota {dimensions = array<i32: 1>} : vector<4x8x32xi32>
    %16 = vector.shape_cast %14 : vector<4x1xi32> to vector<4x1x1xi32>
    %17 = vector.broadcast %16 : vector<4x1x1xi32> to vector<4x8x32xi32>
    %18 = arith.cmpi eq, %15, %17 : vector<4x8x32xi32>
    %cst_6 = arith.constant 0.000000e+00 : f32
    %19 = vector.broadcast %cst_6 : f32 to vector<4x8x32xf32>
    %20 = arith.select %18, %1, %19 : vector<4x8x32xi1>, vector<4x8x32xf32>
    %cst_7 = arith.constant dense<0.000000e+00> : vector<4x32xf32>
    %21 = vector.multi_reduction <add>, %20, %cst_7 [1] : vector<4x8x32xf32> to vector<4x32xf32>
    %c0_8 = arith.constant 0 : index
    %c0_9 = arith.constant 0 : index
    %22 = vector.load %arg3[%c0_8, %c0_9] : memref<4x32xf32, #tpu.memory_space<vmem>>, vector<4x32xf32>
    tpu.vector_store %arg3[%c0_8, %c0_9], %21 {strides = array<i32>} : memref<4x32xf32, #tpu.memory_space<vmem>>, vector<4x32xf32>,
    return
  }
  func.func @transform_0(%arg0: i32) -> (i32, i32) {
    %c0_i32 = arith.constant 0 : i32
    %c0_i32_0 = arith.constant 0 : i32
    return %arg0, %c0_i32 : i32, i32
  }
  func.func @transform_1(%arg0: i32) -> (i32, i32, i32) {
    %c0_i32 = arith.constant 0 : i32
    %c0_i32_0 = arith.constant 0 : i32
    %c0_i32_1 = arith.constant 0 : i32
    return %arg0, %c0_i32, %c0_i32_0 : i32, i32, i32
  }
  func.func @transform_2(%arg0: i32) -> (i32, i32) {
    %c0_i32 = arith.constant 0 : i32
    %c0_i32_0 = arith.constant 0 : i32
    return %arg0, %c0_i32 : i32, i32
  }
}

</mosaic_0001>

<llo_original>
// kernel: tpu_custom_call.1
$region0: #{tpu_custom_call.1}
  #allocation0 [shape = 'u32[]', space=smem, size = 0x4, offset = 0x4, fixed_abs, tag = 'smem constant byte address 0x4 - core index']
  #allocation1 [shape = 'u32[144,128]{1,0:T(1,128)}', space=vmem, size = 0x12000, scoped, tag = 'internal scratch']
  %s0 = inlined_call_operand.hbm [shape: f32[4,32], index: 0, kind: input, shape index: {}]
  %s1 = inlined_call_operand.hbm [shape: f32[4,8,32], index: 1, kind: input, shape index: {}]
  %s2 = inlined_call_operand.hbm [shape: f32[4,32], index: 2, kind: output, shape index: {}]
  %s3 = sld [smem:[#allocation0]]
  $region26: #{tpu_custom_call.1} parent=0
    _
  %s5 = ssub.s32 1, %s3
  %s6 = scalar_select 0, %s5, %s3
  $region1: #{tpu_custom_call.1} parent=0
    #allocation2 [shape = 'u8[2048]{0}', space=vmem, size = 0x800, scoped, tag = 'input window, operand 0, single buffered']
    #allocation3 [shape = 's32[1]{0}', space=sflag, size = 0x4, scoped, tag = 'scoped memory for tpu_custom_call.1']
    #allocation4 [shape = 's32[1]{0}', space=sflag, size = 0x4, scoped, tag = 'scoped memory for tpu_custom_call.1']
    #allocation5 [shape = 'u8[16384]{0}', space=vmem, size = 0x4000, scoped, tag = 'input window, operand 1, single buffered']
    #allocation6 [shape = 's32[1]{0}', space=sflag, size = 0x4, scoped, tag = 'scoped memory for tpu_custom_call.1']
    #allocation7 [shape = 'u8[2048]{0}', space=vmem, size = 0x800, scoped, tag = 'output window, operand 0, single buffered']
    %7 = vsyncpa [#allocation3], 0
    %8 = vsyncpa [#allocation6], 0
    %9 = vsyncpa [#allocation4], 0
    // Predicated region
    $region2: #{tpu_custom_call.1} parent=1 // pred_check
      _
    $region3: #{tpu_custom_call.1} parent=1 // pred_check_branch
      %11 = sbr.rel (0) target = $region5
    $region4: #{tpu_custom_call.1} parent=1 // pred_region
      %s13 = ssub.s32 64, 64
      %14 = vsyncadd [#allocation3], %s13
      %s16 = sshll.u32 [#allocation2], 4
      %s17 = int_to_ptr.vmem [resolvable:$true] %s16
      %19 = dma.hbm_to_vmem [thread:$0]  %s0, 64, %s17, [#allocation3]
    $region5: #{tpu_custom_call.1} parent=1 // pred_fallthru
      _
    // Predicated region
    $region6: #{tpu_custom_call.1} parent=1 // pred_check
      _
    $region7: #{tpu_custom_call.1} parent=1 // pred_check_branch
      %21 = sbr.rel (0) target = $region9
    $region8: #{tpu_custom_call.1} parent=1 // pred_region
      %s23 = ssub.s32 512, 512
      %24 = vsyncadd [#allocation6], %s23
      %s25 = sshll.u32 [#allocation5], 4
      %s26 = int_to_ptr.vmem [resolvable:$true] %s25
      %31 = dma.hbm_to_vmem [thread:$0]  %s1, 512, %s26, [#allocation6], 128, 128, 8
    $region9: #{tpu_custom_call.1} parent=1 // pred_fallthru
      _
    // Predicated region
    $region10: #{tpu_custom_call.1} parent=1 // pred_check
      _
    $region11: #{tpu_custom_call.1} parent=1 // pred_check_branch
      %33 = sbr.rel (0) target = $region13
    $region12: #{tpu_custom_call.1} parent=1 // pred_region
      %34 = dma.done [#allocation3], 64
    $region13: #{tpu_custom_call.1} parent=1 // pred_fallthru
      _
    // Predicated region
    $region14: #{tpu_custom_call.1} parent=1 // pred_check
      _
    $region15: #{tpu_custom_call.1} parent=1 // pred_check_branch
      %36 = sbr.rel (0) target = $region17
    $region16: #{tpu_custom_call.1} parent=1 // pred_region
      %37 = dma.done [#allocation6], 512
    $region17: #{tpu_custom_call.1} parent=1 // pred_fallthru
      _
    %v38 = vld [vmem:[#allocation2] sm:$0xf]
    %v39 = vld [vmem:[#allocation5] sm:$0xff]
    %v40 = vld [vmem:[#allocation5 + $0x8] sm:$0xff]
    %v41 = vld [vmem:[#allocation5 + $0x10] sm:$0xff]
    %v42 = vld [vmem:[#allocation5 + $0x18] sm:$0xff]
    %v45 = vunpack.c.l.s4 1966171168
    %v46 = vunpack.c.0.s8 %v45
    %v47 = vlaneseq
    %v48 = vshrl.u32 %v47, 7
    %v49 = vsub.s32 %v46, %v48
    %v50 = vrot.slane %v38, %v49
    %v51 = vcombine.high %v50, %v50
    %v53 = vunpack.c.l.s4 1966171168
    %v54 = vunpack.c.0.s8 %v53
    %v55 = vlaneseq
    %v56 = vshrl.u32 %v55, 7
    %v57 = vsub.s32 %v54, %v56
    %v58 = vrot.slane %v50, %v57
    %v60 = vunpack.c.l.s4 1966171168
    %v61 = vunpack.c.0.s8 %v60
    %v62 = vlaneseq
    %v63 = vshrl.u32 %v62, 7
    %v64 = vsub.s32 %v61, %v63
    %v65 = vrot.slane %v51, %v64
    %v66 = vcombine.high %v58, %v58
    %v67 = vcombine.high %v65, %v65
    %v68 = vlaneseq
    %v69 = vshrl.u32 %v68, 7
    %v70 = vsub.s32 0, %v69
    %v71 = vrot.slane %v58, %v70
    %v72 = vlaneseq
    %v73 = vshrl.u32 %v72, 7
    %v74 = vsub.s32 0, %v73
    %v75 = vrot.slane %v65, %v74
    %v76 = vlaneseq
    %v77 = vshrl.u32 %v76, 7
    %v78 = vsub.s32 0, %v77
    %v79 = vrot.slane %v66, %v78
    %v80 = vlaneseq
    %v81 = vshrl.u32 %v80, 7
    %v82 = vsub.s32 0, %v81
    %v83 = vrot.slane %v67, %v82
    %v88 = vmul.f32 %v39, %v71
    %v89 = vmul.f32 %v40, %v75
    %v90 = vmul.f32 %v41, %v79
    %v91 = vmul.f32 %v42, %v83
    %vm92 = vcmask 261120
    %v93 = vsel %vm92, %v88, 0.0
    %94 = vadd.xlane.f32.xlu0 %v93
    %v95 = vpop.xlane.xlu0 %94
    %v96 = vsel %vm92, %v89, 0.0
    %97 = vadd.xlane.f32.xlu0 %v96
    %v98 = vpop.xlane.xlu0 %97
    %v99 = vsel %vm92, %v90, 0.0
    %100 = vadd.xlane.f32.xlu0 %v99
    %v101 = vpop.xlane.xlu0 %100
    %v102 = vsel %vm92, %v91, 0.0
    %103 = vadd.xlane.f32.xlu0 %v102
    %v104 = vpop.xlane.xlu0 %103
    %v109 = vlaneseq
    %v110 = vand.u32 %v109, 127
    %v111 = vlaneseq
    %v112 = vshrl.u32 %v111, 7
    %v113 = vsub.s32 %v110, %v112
    %v114 = vrot.slane %v95, %v113
    %v115 = vlaneseq
    %v116 = vshrl.u32 %v115, 7
    %v117 = vsub.s32 %v110, %v116
    %v118 = vrot.slane %v98, %v117
    %v119 = vlaneseq
    %v120 = vshrl.u32 %v119, 7
    %v121 = vsub.s32 %v110, %v120
    %v122 = vrot.slane %v101, %v121
    %v123 = vlaneseq
    %v124 = vshrl.u32 %v123, 7
    %v125 = vsub.s32 %v110, %v124
    %v126 = vrot.slane %v104, %v125
    %vm127 = vcmask 1041409
    %v128 = vsel %vm127, %v118, %v114
    %vm129 = vcmask 1042434
    %v130 = vsel %vm129, %v122, %v128
    %vm131 = vcmask 1043459
    %v132 = vsel %vm131, %v126, %v130
    %vm134 = vcmask 60416
    %v135 = vsel %vm134, %v132, -inf
    %136 = vmax.xlane.f32.xlu0 %v135
    %v137 = vpop.xlane.xlu0 %136
    %v139 = vlaneseq
    %v140 = vshrl.u32 %v139, 7
    %v141 = vsub.s32 0, %v140
    %v142 = vrot.slane %v137, %v141
    %v143 = vlaneseq
    %v144 = vshrl.u32 %v143, 7
    %v145 = vsub.s32 1, %v144
    %v146 = vrot.slane %v137, %v145
    %v147 = vlaneseq
    %v148 = vshrl.u32 %v147, 7
    %v149 = vsub.s32 2, %v148
    %v150 = vrot.slane %v137, %v149
    %v151 = vlaneseq
    %v152 = vshrl.u32 %v151, 7
    %v153 = vsub.s32 3, %v152
    %v154 = vrot.slane %v137, %v153
    %vm159 = vcmp.ge.f32.partialorder %v95, %v142
    %vm160 = vcmp.ge.f32.partialorder %v98, %v146
    %vm161 = vcmp.ge.f32.partialorder %v101, %v150
    %vm162 = vcmp.ge.f32.partialorder %v104, %v154
    %164 = vbcast.lane.b32.xlu0 %v110, 256
    %v165 = vpop.permute.xlu0 %164
    %v166 = vsel %vm159, %v165, 8
    %v167 = vsel %vm160, %v165, 8
    %v168 = vsel %vm161, %v165, 8
    %v169 = vsel %vm162, %v165, 8
    %170 = vset.pattern.permute.xlu0 0
    %171 = vperm.xlu0 %170, %v166
    %v172 = vpop.permute.xlu0 %171
    %173 = vset.pattern.permute.xlu0 0
    %174 = vperm.xlu0 %173, %v167
    %v175 = vpop.permute.xlu0 %174
    %176 = vset.pattern.permute.xlu0 0
    %177 = vperm.xlu0 %176, %v168
    %v178 = vpop.permute.xlu0 %177
    %179 = vset.pattern.permute.xlu0 0
    %180 = vperm.xlu0 %179, %v169
    %v181 = vpop.permute.xlu0 %180
    %v182 = vlaneseq
    %v183 = vshrl.u32 %v182, 7
    %v184 = vsub.s32 %v110, %v183
    %v185 = vrot.slane %v172, %v184
    %v186 = vlaneseq
    %v187 = vshrl.u32 %v186, 7
    %v188 = vsub.s32 %v110, %v187
    %v189 = vrot.slane %v175, %v188
    %v190 = vlaneseq
    %v191 = vshrl.u32 %v190, 7
    %v192 = vsub.s32 %v110, %v191
    %v193 = vrot.slane %v178, %v192
    %v194 = vlaneseq
    %v195 = vshrl.u32 %v194, 7
    %v196 = vsub.s32 %v110, %v195
    %v197 = vrot.slane %v181, %v196
    %v198 = vsel %vm127, %v189, %v185
    %v199 = vsel %vm129, %v193, %v198
    %v200 = vsel %vm131, %v197, %v199
    %v201 = vsel %vm134, %v200, 2147483647
    %v202 = vand.u32 %v201, 65535
    %v203 = vshra.s32 %v201, 16
    %v204 = vcvt.s32.f32 %v202
    %v205 = vcvt.s32.f32 %v203
    %206 = vmin.xlane.f32.xlu0 %v205
    %v207 = vpop.xlane.xlu0 %206
    %vm208 = vcmp.eq.f32.partialorder %v205, %v207
    %v209 = vsel %vm208, %v204, inf
    %210 = vmin.xlane.f32.xlu0 %v209
    %v211 = vpop.xlane.xlu0 %210
    %v212 = vcvt.f32.s32 %v211
    %v213 = vcvt.f32.s32 %v207
    %v214 = vshll.u32 %v213, 16
    %v215 = vadd.s32 %v214, %v212
    %v216 = vlaneseq
    %v217 = vshrl.u32 %v216, 7
    %v218 = vlaneseq
    %v219 = vshrl.u32 %v218, 7
    %v220 = vsub.s32 0, %v219
    %v221 = vrot.slane %v215, %v220
    %v222 = vlaneseq
    %v223 = vshrl.u32 %v222, 7
    %v224 = vsub.s32 1, %v223
    %v225 = vrot.slane %v215, %v224
    %v226 = vlaneseq
    %v227 = vshrl.u32 %v226, 7
    %v228 = vsub.s32 2, %v227
    %v229 = vrot.slane %v215, %v228
    %v230 = vlaneseq
    %v231 = vshrl.u32 %v230, 7
    %v232 = vsub.s32 3, %v231
    %v233 = vrot.slane %v215, %v232
    %vm234 = vcmp.eq.s32.totalorder %v217, %v221
    %vm235 = vcmp.eq.s32.totalorder %v217, %v225
    %vm236 = vcmp.eq.s32.totalorder %v217, %v229
    %vm237 = vcmp.eq.s32.totalorder %v217, %v233
    %v238 = vsel %vm234, %v39, 0.0
    %v239 = vsel %vm235, %v40, 0.0
    %v240 = vsel %vm236, %v41, 0.0
    %v241 = vsel %vm237, %v42, 0.0
    %v242 = vsel %vm92, %v238, 0.0
    %v243 = vrot.slane %v242, 4
    %v244 = vadd.f32 %v242, %v243
    %v245 = vrot.slane %v244, 2
    %v246 = vadd.f32 %v244, %v245
    %v247 = vrot.slane %v246, 1
    %v248 = vadd.f32 %v246, %v247
    %v249 = vsel %vm92, %v239, 0.0
    %v250 = vrot.slane %v249, 4
    %v251 = vadd.f32 %v249, %v250
    %v252 = vrot.slane %v251, 2
    %v253 = vadd.f32 %v251, %v252
    %v254 = vrot.slane %v253, 1
    %v255 = vadd.f32 %v253, %v254
    %v256 = vsel %vm92, %v240, 0.0
    %v257 = vrot.slane %v256, 4
    %v258 = vadd.f32 %v256, %v257
    %v259 = vrot.slane %v258, 2
    %v260 = vadd.f32 %v258, %v259
    %v261 = vrot.slane %v260, 1
    %v262 = vadd.f32 %v260, %v261
    %v263 = vsel %vm92, %v241, 0.0
    %v264 = vrot.slane %v263, 4
    %v265 = vadd.f32 %v263, %v264
    %v266 = vrot.slane %v265, 2
    %v267 = vadd.f32 %v265, %v266
    %v268 = vrot.slane %v267, 1
    %v269 = vadd.f32 %v267, %v268
    %v274 = vsel %vm127, %v255, %v248
    %v275 = vsel %vm129, %v262, %v274
    %v276 = vsel %vm131, %v269, %v275
    %vm278 = vcmask 257024
    %279 = vst.msk [vmem:[#allocation7] sm:$0xf] %vm278, %v276
    // Predicated region
    $region18: #{tpu_custom_call.1} parent=1 // pred_check
      _
    $region19: #{tpu_custom_call.1} parent=1 // pred_check_branch
      %281 = sbr.rel (0) target = $region21
    $region20: #{tpu_custom_call.1} parent=1 // pred_region
      %s283 = ssub.s32 64, 64
      %284 = vsyncadd [#allocation4], %s283
      %s286 = sshll.u32 [#allocation7], 4
      %s287 = int_to_ptr.vmem [resolvable:$true] %s286
      %289 = dma.vmem_to_hbm [thread:$0]  %s287, 64, %s2, [#allocation4]
    $region21: #{tpu_custom_call.1} parent=1 // pred_fallthru
      _
    // Predicated region
    $region22: #{tpu_custom_call.1} parent=1 // pred_check
      _
    $region23: #{tpu_custom_call.1} parent=1 // pred_check_branch
      %291 = sbr.rel (0) target = $region25
    $region24: #{tpu_custom_call.1} parent=1 // pred_region
      %292 = dma.done [#allocation4], 64
    $region25: #{tpu_custom_call.1} parent=1 // pred_fallthru
      _
    %293 = vsyncpa [#allocation3], 1
    %294 = vsyncpa [#allocation6], 1
    %295 = vsyncpa [#allocation4], 1

</llo_original>
